<compile_context>
chip_gen: v6e
topology: v6e:2x2x1
jax: 0.10.0
libtpu: 0.0.40
codegen_flags: <defaults>
</compile_context>

<pallas_src>
import jax
import jax.numpy as jnp
from jax.experimental import pallas as pl
from jax.experimental.pallas import tpu as pltpu

_LANES = 128


def _interval_bn_kernel(u_ref, l_ref, u_out_ref, l_out_ref, mean_ref, sigma_ref):
    # Blocks: u/l are (B, R, 128); stats are (1, R, 128). Stats math in f32.
    u = u_ref[...].astype(jnp.float32)
    l = l_ref[...].astype(jnp.float32)

    # tmax = where(u > -l, u, l)
    tmax = jnp.where(u > -l, u, l)

    # per-feature mean over the batch dim (axis 0 -> dense VPU adds, no XLU)
    inv_b = jnp.float32(1.0 / u.shape[0])
    mean = jnp.sum(tmax, axis=0, keepdims=True) * inv_b          # (1, R, 128)

    # sigma = L2 norm over batch of (tmax - mean); matches torch.norm(dim=0)
    diff = tmax - mean
    sumsq = jnp.sum(diff * diff, axis=0, keepdims=True)          # (1, R, 128)
    sigma = jnp.sqrt(sumsq)

    # Reciprocal on the EUP; sigma==0 -> inf/NaN exactly like torch's divide-by-zero.
    inv_sigma = 1.0 / sigma

    u_out_ref[...] = ((u - mean) * inv_sigma).astype(u_out_ref.dtype)
    l_out_ref[...] = ((l - mean) * inv_sigma).astype(l_out_ref.dtype)
    mean_ref[...] = mean.astype(mean_ref.dtype)
    sigma_ref[...] = sigma.astype(sigma_ref.dtype)


def _cdiv(a, b):
    return -(-a // b)


def _chip_caps():
    """Returns (per-input block byte cap, vmem_limit cap, prefer_even_grid_steps)."""
    kind = ""
    try:
        kind = jax.devices()[0].device_kind.lower()
    except Exception:
        pass
    if "v7" in kind:
        # 64 MiB VMEM per TC, 2 TCs: modest blocks, even step count for megacore.
        return (3 << 20, 48 << 20, True)
    if "v6" in kind:
        # 128 MiB VMEM, single TC: big blocks, single grid step is fine.
        return (6 << 20, 64 << 20, False)
    if "v5" in kind:
        return (4 << 20, 64 << 20, False)
    # Unknown chip: conservative defaults.
    return (4 << 20, 48 << 20, False)


def _pick_tile_rows(n_blk, batch, itemsize, sublane, block_bytes_cap, prefer_even):
    """Rows per feature-block tile. Always a multiple of `sublane` or == n_blk."""
    rows_budget = block_bytes_cap // max(1, batch * _LANES * itemsize)
    rows_budget = max(sublane, (rows_budget // sublane) * sublane)
    if n_blk <= rows_budget:
        return n_blk                      # single step, full row extent
    tile_rows = rows_budget
    if prefer_even:
        # v7x: try to make the grid-step count even so both TCs get equal work.
        t = tile_rows
        while t > sublane and _cdiv(n_blk, t) % 2 == 1:
            t -= sublane
        if _cdiv(n_blk, t) % 2 == 0:
            tile_rows = t
    return tile_rows


def interval_bn_forward(u, l):
    """u, l: arrays of identical shape (batch-first). Returns (u_norm, l_norm, mean, sigma).

    u_norm/l_norm keep the input dtype and shape; mean/sigma are float32, shape (1, F)
    with F = prod(shape[1:]) (matching the PyTorch .view(batch, -1))."""
    assert u.shape == l.shape and u.dtype == l.dtype
    shape = u.shape
    B = shape[0]
    F = 1
    for s in shape[1:]:
        F *= s

    out_dtype = u.dtype
    itemsize = jnp.dtype(u.dtype).itemsize
    sublane = max(8, 32 // itemsize)      # 8 for f32, 16 for bf16, 32 for int8/fp8

    # Pad the feature axis to a multiple of 128 lanes. Zero padding is inert: all
    # reductions are over the batch axis, and padded lanes are sliced off below.
    F_pad = _cdiv(F, _LANES) * _LANES
    u2 = u.reshape(B, F)
    l2 = l.reshape(B, F)
    if F_pad != F:
        pad = ((0, 0), (0, F_pad - F))
        u2 = jnp.pad(u2, pad)
        l2 = jnp.pad(l2, pad)
    n_blk = F_pad // _LANES

    # Lane/sublane-dense layout: (B, n_blk, 128). Reshape is contiguous.
    u3 = u2.reshape(B, n_blk, _LANES)
    l3 = l2.reshape(B, n_blk, _LANES)

    block_cap, vmem_cap, prefer_even = _chip_caps()
    tile_rows = _pick_tile_rows(n_blk, B, itemsize, sublane, block_cap, prefer_even)
    grid = (_cdiv(n_blk, tile_rows),)     # ragged last block is masked by Pallas
    # TODO(synk): on v7x with very large batch the per-batch DMA slab
    # (tile_rows*128*itemsize) gets small; deepen buffering with
    # pipeline_mode=pl.Buffered(3) on the input specs if DMA latency is exposed.

    io_spec = pl.BlockSpec((B, tile_rows, _LANES), lambda j: (0, j, 0))
    stat_spec = pl.BlockSpec((1, tile_rows, _LANES), lambda j: (0, j, 0))

    # VMEM budget: double-buffered 2 inputs + 2 outputs + 2 stat blocks + headroom.
    io_bytes = B * tile_rows * _LANES * itemsize
    stat_bytes = tile_rows * _LANES * 4
    vmem_bytes = 2 * (4 * io_bytes + 2 * stat_bytes) + (8 << 20)
    vmem_bytes = int(min(max(vmem_bytes, 32 << 20), vmem_cap))

    cost = pl.CostEstimate(
        flops=12 * B * F_pad,
        transcendentals=2 * F_pad,
        bytes_accessed=4 * B * F_pad * itemsize + 2 * F_pad * 4,
    )

    u_out, l_out, mean, sigma = pl.pallas_call(
        _interval_bn_kernel,
        out_shape=(
            jax.ShapeDtypeStruct((B, n_blk, _LANES), out_dtype),
            jax.ShapeDtypeStruct((B, n_blk, _LANES), out_dtype),
            jax.ShapeDtypeStruct((1, n_blk, _LANES), jnp.float32),
            jax.ShapeDtypeStruct((1, n_blk, _LANES), jnp.float32),
        ),
        grid_spec=pltpu.PrefetchScalarGridSpec(
            num_scalar_prefetch=0,
            grid=grid,
            in_specs=[io_spec, io_spec],
            out_specs=[io_spec, io_spec, stat_spec, stat_spec],
        ),
        compiler_params=pltpu.CompilerParams(
            dimension_semantics=("parallel",),
            vmem_limit_bytes=vmem_bytes,
        ),
        cost_estimate=cost,
        input_output_aliases={0: 0, 1: 1},   # u/l normalized in place, as in PyTorch
    )(u3, l3)

    u_out = u_out.reshape(B, F_pad)[:, :F].reshape(shape)
    l_out = l_out.reshape(B, F_pad)[:, :F].reshape(shape)
    mean = mean.reshape(1, F_pad)[:, :F]
    sigma = sigma.reshape(1, F_pad)[:, :F]
    return u_out, l_out, mean, sigma


def _reference(u, l):
    shape = u.shape
    B = shape[0]
    u2 = u.reshape(B, -1).astype(jnp.float32)
    l2 = l.reshape(B, -1).astype(jnp.float32)
    tmax = jnp.where(u2 > -l2, u2, l2)
    mean = jnp.mean(tmax, axis=0, keepdims=True)
    sigma = jnp.sqrt(jnp.sum((tmax - mean) ** 2, axis=0, keepdims=True))
    un = ((u2 - mean) / sigma).reshape(shape)
    ln = ((l2 - mean) / sigma).reshape(shape)
    return un, ln, mean, sigma


if __name__ == "__main__":
    key = jax.random.PRNGKey(0)
    k1, k2 = jax.random.split(key)

    B, C, H, W = 2, 4, 16, 16  # F = 1024 -> 8 row-blocks of 128 lanes
    center = jax.random.normal(k1, (B, C, H, W), dtype=jnp.float32)
    radius = jnp.abs(jax.random.normal(k2, (B, C, H, W), dtype=jnp.float32)) * 0.1
    u = center + radius   # upper bounds
    l = center - radius   # lower bounds

    # Compute the plain-JAX reference first (inputs stay pristine regardless of
    # any aliasing/donation decisions XLA makes for the pallas_call).
    u_ref, l_ref, m_ref, s_ref = _reference(u, l)

    u_out, l_out, mean, sigma = interval_bn_forward(u, l)
    jax.block_until_ready((u_out, l_out, mean, sigma))

    assert jnp.allclose(u_out, u_ref, atol=1e-5, rtol=1e-5)
    assert jnp.allclose(l_out, l_ref, atol=1e-5, rtol=1e-5)
    assert jnp.allclose(mean, m_ref, atol=1e-5, rtol=1e-5)
    assert jnp.allclose(sigma, s_ref, atol=1e-5, rtol=1e-5)

    print("KERNEL_OK")
</pallas_src>

<mosaic_0001>
module attributes {stable_mosaic.version = 11 : i64} {
  func.func @_interval_bn_kernel(%arg0: i32, %arg1: memref<2x8x128xf32, #tpu.memory_space<vmem>>, %arg2: memref<2x8x128xf32, #tpu.memory_space<vmem>>, %arg3: memref<2x8x128xf32, #tpu.memory_space<vmem>>, %arg4: memref<2x8x128xf32, #tpu.memory_space<vmem>>, %arg5: memref<1x8x128xf32, #tpu.memory_space<vmem>>, %arg6: memref<1x8x128xf32, #tpu.memory_space<vmem>>) attributes {dimension_semantics = [#tpu.dimension_semantics<parallel>], iteration_bounds = array<i64: 1>, scalar_prefetch = 0 : i64, scratch_operands = 0 : i64, tpu.core_type = #tpu.core_type<tc>, window_params = [{transform_indices = @transform_0, window_bounds = array<i64: 2, 8, 128>}, {transform_indices = @transform_1, window_bounds = array<i64: 2, 8, 128>}, {transform_indices = @transform_2, window_bounds = array<i64: 2, 8, 128>}, {transform_indices = @transform_3, window_bounds = array<i64: 2, 8, 128>}, {transform_indices = @transform_4, window_bounds = array<i64: 1, 8, 128>}, {transform_indices = @transform_5, window_bounds = array<i64: 1, 8, 128>}]} {
    %c0 = arith.constant 0 : index
    %c0_0 = arith.constant 0 : index
    %c0_1 = arith.constant 0 : index
    %0 = vector.load %arg1[%c0, %c0_0, %c0_1] : memref<2x8x128xf32, #tpu.memory_space<vmem>>, vector<2x8x128xf32>
    %c0_2 = arith.constant 0 : index
    %c0_3 = arith.constant 0 : index
    %c0_4 = arith.constant 0 : index
    %1 = vector.load %arg2[%c0_2, %c0_3, %c0_4] : memref<2x8x128xf32, #tpu.memory_space<vmem>>, vector<2x8x128xf32>
    %cst = arith.constant 0.000000e+00 : f32
    %2 = vector.broadcast %cst : f32 to vector<2x8x128xf32>
    %3 = arith.subf %2, %1 : vector<2x8x128xf32>
    %4 = arith.cmpf ogt, %0, %3 : vector<2x8x128xf32>
    %5 = arith.select %4, %0, %1 : vector<2x8x128xi1>, vector<2x8x128xf32>
    %cst_5 = arith.constant dense<0.000000e+00> : vector<8x128xf32>
    %6 = vector.multi_reduction <add>, %5, %cst_5 [0] : vector<2x8x128xf32> to vector<8x128xf32>
    %7 = vector.shape_cast %6 : vector<8x128xf32> to vector<1x8x128xf32>
    %cst_6 = arith.constant 5.000000e-01 : f32
    %8 = vector.broadcast %cst_6 : f32 to vector<1x8x128xf32>
    %9 = arith.mulf %7, %8 : vector<1x8x128xf32>
    %10 = vector.broadcast %9 : vector<1x8x128xf32> to vector<2x8x128xf32>
    %11 = arith.subf %5, %10 : vector<2x8x128xf32>
    %12 = arith.mulf %11, %11 : vector<2x8x128xf32>
    %cst_7 = arith.constant dense<0.000000e+00> : vector<8x128xf32>
    %13 = vector.multi_reduction <add>, %12, %cst_7 [0] : vector<2x8x128xf32> to vector<8x128xf32>
    %14 = vector.shape_cast %13 : vector<8x128xf32> to vector<1x8x128xf32>
    %15 = math.sqrt %14 : vector<1x8x128xf32>
    %cst_8 = arith.constant 1.000000e+00 : f32
    %16 = vector.broadcast %cst_8 : f32 to vector<1x8x128xf32>
    %17 = arith.divf %16, %15 : vector<1x8x128xf32>
    %18 = vector.broadcast %9 : vector<1x8x128xf32> to vector<2x8x128xf32>
    %19 = arith.subf %0, %18 : vector<2x8x128xf32>
    %20 = vector.broadcast %17 : vector<1x8x128xf32> to vector<2x8x128xf32>
    %21 = arith.mulf %19, %20 : vector<2x8x128xf32>
    %c0_9 = arith.constant 0 : index
    %c0_10 = arith.constant 0 : index
    %c0_11 = arith.constant 0 : index
    %22 = vector.load %arg3[%c0_9, %c0_10, %c0_11] : memref<2x8x128xf32, #tpu.memory_space<vmem>>, vector<2x8x128xf32>
    tpu.vector_store %arg3[%c0_9, %c0_10, %c0_11], %21 {strides = array<i32>} : memref<2x8x128xf32, #tpu.memory_space<vmem>>, vector<2x8x128xf32>,
    %23 = vector.broadcast %9 : vector<1x8x128xf32> to vector<2x8x128xf32>
    %24 = arith.subf %1, %23 : vector<2x8x128xf32>
    %25 = vector.broadcast %17 : vector<1x8x128xf32> to vector<2x8x128xf32>
    %26 = arith.mulf %24, %25 : vector<2x8x128xf32>
    %c0_12 = arith.constant 0 : index
    %c0_13 = arith.constant 0 : index
    %c0_14 = arith.constant 0 : index
    %27 = vector.load %arg4[%c0_12, %c0_13, %c0_14] : memref<2x8x128xf32, #tpu.memory_space<vmem>>, vector<2x8x128xf32>
    tpu.vector_store %arg4[%c0_12, %c0_13, %c0_14], %26 {strides = array<i32>} : memref<2x8x128xf32, #tpu.memory_space<vmem>>, vector<2x8x128xf32>,
    %c0_15 = arith.constant 0 : index
    %c0_16 = arith.constant 0 : index
    %c0_17 = arith.constant 0 : index
    %28 = vector.load %arg5[%c0_15, %c0_16, %c0_17] : memref<1x8x128xf32, #tpu.memory_space<vmem>>, vector<1x8x128xf32>
    tpu.vector_store %arg5[%c0_15, %c0_16, %c0_17], %9 {strides = array<i32>} : memref<1x8x128xf32, #tpu.memory_space<vmem>>, vector<1x8x128xf32>,
    %c0_18 = arith.constant 0 : index
    %c0_19 = arith.constant 0 : index
    %c0_20 = arith.constant 0 : index
    %29 = vector.load %arg6[%c0_18, %c0_19, %c0_20] : memref<1x8x128xf32, #tpu.memory_space<vmem>>, vector<1x8x128xf32>
    tpu.vector_store %arg6[%c0_18, %c0_19, %c0_20], %15 {strides = array<i32>} : memref<1x8x128xf32, #tpu.memory_space<vmem>>, vector<1x8x128xf32>,
    return
  }
  func.func @transform_0(%arg0: i32) -> (i32, i32, i32) {
    %c0_i32 = arith.constant 0 : i32
    %c0_i32_0 = arith.constant 0 : i32
    %c0_i32_1 = arith.constant 0 : i32
    return %c0_i32, %arg0, %c0_i32_0 : i32, i32, i32
  }
  func.func @transform_1(%arg0: i32) -> (i32, i32, i32) {
    %c0_i32 = arith.constant 0 : i32
    %c0_i32_0 = arith.constant 0 : i32
    %c0_i32_1 = arith.constant 0 : i32
    return %c0_i32, %arg0, %c0_i32_0 : i32, i32, i32
  }
  func.func @transform_2(%arg0: i32) -> (i32, i32, i32) {
    %c0_i32 = arith.constant 0 : i32
    %c0_i32_0 = arith.constant 0 : i32
    %c0_i32_1 = arith.constant 0 : i32
    return %c0_i32, %arg0, %c0_i32_0 : i32, i32, i32
  }
  func.func @transform_3(%arg0: i32) -> (i32, i32, i32) {
    %c0_i32 = arith.constant 0 : i32
    %c0_i32_0 = arith.constant 0 : i32
    %c0_i32_1 = arith.constant 0 : i32
    return %c0_i32, %arg0, %c0_i32_0 : i32, i32, i32
  }
  func.func @transform_4(%arg0: i32) -> (i32, i32, i32) {
    %c0_i32 = arith.constant 0 : i32
    %c0_i32_0 = arith.constant 0 : i32
    %c0_i32_1 = arith.constant 0 : i32
    return %c0_i32, %arg0, %c0_i32_0 : i32, i32, i32
  }
  func.func @transform_5(%arg0: i32) -> (i32, i32, i32) {
    %c0_i32 = arith.constant 0 : i32
    %c0_i32_0 = arith.constant 0 : i32
    %c0_i32_1 = arith.constant 0 : i32
    return %c0_i32, %arg0, %c0_i32_0 : i32, i32, i32
  }
}

</mosaic_0001>

<llo_original>
// kernel: tpu_custom_call.1
$region0: #{tpu_custom_call.1}
  #allocation0 [shape = 'u32[]', space=smem, size = 0x4, offset = 0x4, fixed_abs, tag = 'smem constant byte address 0x4 - core index']
  #allocation1 [shape = 'u32[144,128]{1,0:T(1,128)}', space=vmem, size = 0x12000, scoped, tag = 'internal scratch']
  %s0 = inlined_call_operand.hbm [shape: f32[2,8,128], index: 0, kind: input, shape index: {}, may-alias: {0,2}]
  %s1 = inlined_call_operand.hbm [shape: f32[2,8,128], index: 1, kind: input, shape index: {}, may-alias: {1,3}]
  %s2 = inlined_call_operand.hbm [shape: f32[2,8,128], index: 2, kind: output, shape index: {0}, may-alias: {0,2}]
  %s3 = inlined_call_operand.hbm [shape: f32[2,8,128], index: 3, kind: output, shape index: {1}, may-alias: {1,3}]
  %s4 = inlined_call_operand.hbm [shape: f32[1,8,128], index: 4, kind: output, shape index: {2}]
  %s5 = inlined_call_operand.hbm [shape: f32[1,8,128], index: 5, kind: output, shape index: {3}]
  %6 = xla_tuple %s2, %s3, %s4, %s5
  %s7 = sld [smem:[#allocation0]]
  $region50: #{tpu_custom_call.1} parent=0
    _
  %s9 = ssub.s32 1, %s7
  %s10 = scalar_select 0, %s9, %s7
  $region1: #{tpu_custom_call.1} parent=0
    #allocation2 [shape = 'u8[8192]{0}', space=vmem, size = 0x2000, scoped, tag = 'input window, operand 0, single buffered']
    #allocation3 [shape = 's32[1]{0}', space=sflag, size = 0x4, scoped, tag = 'scoped memory for tpu_custom_call.1']
    #allocation4 [shape = 's32[1]{0}', space=sflag, size = 0x4, scoped, tag = 'scoped memory for tpu_custom_call.1']
    #allocation5 [shape = 'u8[8192]{0}', space=vmem, size = 0x2000, scoped, tag = 'input window, operand 1, single buffered']
    #allocation6 [shape = 's32[1]{0}', space=sflag, size = 0x4, scoped, tag = 'scoped memory for tpu_custom_call.1']
    #allocation7 [shape = 'u8[8192]{0}', space=vmem, size = 0x2000, scoped, tag = 'output window, operand 0, single buffered']
    #allocation8 [shape = 'u8[8192]{0}', space=vmem, size = 0x2000, scoped, tag = 'output window, operand 1, single buffered']
    #allocation9 [shape = 's32[1]{0}', space=sflag, size = 0x4, scoped, tag = 'scoped memory for tpu_custom_call.1']
    #allocation10 [shape = 'u8[4096]{0}', space=vmem, size = 0x1000, scoped, tag = 'output window, operand 2, single buffered']
    #allocation11 [shape = 'u8[4096]{0}', space=vmem, size = 0x1000, scoped, tag = 'output window, operand 3, single buffered']
    #allocation12 [shape = 's32[1]{0}', space=sflag, size = 0x4, scoped, tag = 'scoped memory for tpu_custom_call.1']
    %11 = vsyncpa [#allocation3], 0
    %12 = vsyncpa [#allocation6], 0
    %13 = vsyncpa [#allocation4], 0
    %14 = vsyncpa [#allocation9], 0
    %15 = vsyncpa [#allocation12], 0
    // Predicated region
    $region2: #{tpu_custom_call.1} parent=1 // pred_check
      _
    $region3: #{tpu_custom_call.1} parent=1 // pred_check_branch
      %17 = sbr.rel (0) target = $region5
    $region4: #{tpu_custom_call.1} parent=1 // pred_region
      %s19 = ssub.s32 256, 256
      %20 = vsyncadd [#allocation3], %s19
      %s21 = sshll.u32 [#allocation2], 4
      %s22 = int_to_ptr.vmem [resolvable:$true] %s21
      %27 = dma.hbm_to_vmem [thread:$0]  %s0, 256, %s22, [#allocation3], 128, 128, 8
    $region5: #{tpu_custom_call.1} parent=1 // pred_fallthru
      _
    // Predicated region
    $region6: #{tpu_custom_call.1} parent=1 // pred_check
      _
    $region7: #{tpu_custom_call.1} parent=1 // pred_check_branch
      %29 = sbr.rel (0) target = $region9
    $region8: #{tpu_custom_call.1} parent=1 // pred_region
      %s31 = ssub.s32 256, 256
      %32 = vsyncadd [#allocation6], %s31
      %s33 = sshll.u32 [#allocation5], 4
      %s34 = int_to_ptr.vmem [resolvable:$true] %s33
      %39 = dma.hbm_to_vmem [thread:$0]  %s1, 256, %s34, [#allocation6], 128, 128, 8
    $region9: #{tpu_custom_call.1} parent=1 // pred_fallthru
      _
    // Predicated region
    $region10: #{tpu_custom_call.1} parent=1 // pred_check
      _
    $region11: #{tpu_custom_call.1} parent=1 // pred_check_branch
      %41 = sbr.rel (0) target = $region13
    $region12: #{tpu_custom_call.1} parent=1 // pred_region
      %42 = dma.done [#allocation3], 256
    $region13: #{tpu_custom_call.1} parent=1 // pred_fallthru
      _
    // Predicated region
    $region14: #{tpu_custom_call.1} parent=1 // pred_check
      _
    $region15: #{tpu_custom_call.1} parent=1 // pred_check_branch
      %44 = sbr.rel (0) target = $region17
    $region16: #{tpu_custom_call.1} parent=1 // pred_region
      %45 = dma.done [#allocation6], 256
    $region17: #{tpu_custom_call.1} parent=1 // pred_fallthru
      _
    %v46 = vld [vmem:[#allocation2] sm:$0xff]
    %v47 = vld [vmem:[#allocation2 + $0x8] sm:$0xff]
    %v48 = vld [vmem:[#allocation5] sm:$0xff]
    %v49 = vld [vmem:[#allocation5 + $0x8] sm:$0xff]
    %v50 = vsub.f32 0.0, %v48
    %v51 = vsub.f32 0.0, %v49
    %vm52 = vcmp.gt.f32.partialorder %v46, %v50
    %vm53 = vcmp.gt.f32.partialorder %v47, %v51
    %v54 = vsel %vm52, %v46, %v48
    %v55 = vsel %vm53, %v47, %v49
    %v56 = vadd.f32 %v54, %v55
    %v57 = vmul.f32 %v56, 0.5
    %v58 = vsub.f32 %v54, %v57
    %v59 = vsub.f32 %v55, %v57
    %v60 = vmul.f32 %v58, %v58
    %v61 = vmul.f32 %v59, %v59
    %v62 = vadd.f32 %v60, %v61
    %v63 = vrsqrt.pop %v62
    %v64 = vmul.f32 %v62, %v63
    %vm65 = vcmp.eq.f32.partialorder %v62, inf
    %v66 = vsel %vm65, %v62, %v64
    %vm67 = vcmp.eq.f32.partialorder %v62, 0.0
    %v68 = vand.u32 %v62, 2147483648
    %v69 = vsel %vm67, %v68, %v66
    %v70 = vrcp.pop %v69
    %v71 = vmul.f32 1.0, %v70
    %v72 = vsub.f32 %v46, %v57
    %v73 = vsub.f32 %v47, %v57
    %v74 = vmul.f32 %v72, %v71
    %v75 = vmul.f32 %v73, %v71
    %76 = vst [vmem:[#allocation7] sm:$0xff] %v74
    %77 = vst [vmem:[#allocation7 + $0x8] sm:$0xff] %v75
    %v78 = vsub.f32 %v48, %v57
    %v79 = vsub.f32 %v49, %v57
    %v80 = vmul.f32 %v78, %v71
    %v81 = vmul.f32 %v79, %v71
    %82 = vst [vmem:[#allocation8] sm:$0xff] %v80
    %83 = vst [vmem:[#allocation8 + $0x8] sm:$0xff] %v81
    %84 = vst [vmem:[#allocation10] sm:$0xff] %v57
    %85 = vst [vmem:[#allocation11] sm:$0xff] %v69
    // Predicated region
    $region18: #{tpu_custom_call.1} parent=1 // pred_check
      _
    $region19: #{tpu_custom_call.1} parent=1 // pred_check_branch
      %87 = sbr.rel (0) target = $region21
    $region20: #{tpu_custom_call.1} parent=1 // pred_region
      %s89 = ssub.s32 256, 256
      %90 = vsyncadd [#allocation4], %s89
      %s91 = sshll.u32 [#allocation7], 4
      %s92 = int_to_ptr.vmem [resolvable:$true] %s91
      %97 = dma.vmem_to_hbm [thread:$0]  %s92, 256, %s2, [#allocation4], 128, 128, 8
    $region21: #{tpu_custom_call.1} parent=1 // pred_fallthru
      _
    // Predicated region
    $region22: #{tpu_custom_call.1} parent=1 // pred_check
      _
    $region23: #{tpu_custom_call.1} parent=1 // pred_check_branch
      %99 = sbr.rel (0) target = $region25
    $region24: #{tpu_custom_call.1} parent=1 // pred_region
      %s101 = ssub.s32 256, 256
      %102 = vsyncadd [#allocation9], %s101
      %s103 = sshll.u32 [#allocation8], 4
      %s104 = int_to_ptr.vmem [resolvable:$true] %s103
      %109 = dma.vmem_to_hbm [thread:$0]  %s104, 256, %s3, [#allocation9], 128, 128, 8
    $region25: #{tpu_custom_call.1} parent=1 // pred_fallthru
      _
    // Predicated region
    $region26: #{tpu_custom_call.1} parent=1 // pred_check
      _
    $region27: #{tpu_custom_call.1} parent=1 // pred_check_branch
      %111 = sbr.rel (0) target = $region29
    $region28: #{tpu_custom_call.1} parent=1 // pred_region
      %s113 = ssub.s32 128, 128
      %114 = vsyncadd [#allocation9], %s113
      %s116 = sshll.u32 [#allocation10], 4
      %s117 = int_to_ptr.vmem [resolvable:$true] %s116
      %119 = dma.vmem_to_hbm [thread:$0]  %s117, 128, %s4, [#allocation9]
    $region29: #{tpu_custom_call.1} parent=1 // pred_fallthru
      _
    // Predicated region
    $region30: #{tpu_custom_call.1} parent=1 // pred_check
      _
    $region31: #{tpu_custom_call.1} parent=1 // pred_check_branch
      %121 = sbr.rel (0) target = $region33
    $region32: #{tpu_custom_call.1} parent=1 // pred_region
      %s123 = ssub.s32 128, 128
      %124 = vsyncadd [#allocation12], %s123
      %s126 = sshll.u32 [#allocation11], 4
      %s127 = int_to_ptr.vmem [resolvable:$true] %s126
      %129 = dma.vmem_to_hbm [thread:$0]  %s127, 128, %s5, [#allocation12]
    $region33: #{tpu_custom_call.1} parent=1 // pred_fallthru
      _
    // Predicated region
    $region34: #{tpu_custom_call.1} parent=1 // pred_check
      _
    $region35: #{tpu_custom_call.1} parent=1 // pred_check_branch
      %131 = sbr.rel (0) target = $region37
    $region36: #{tpu_custom_call.1} parent=1 // pred_region
      %132 = dma.done [#allocation4], 256
    $region37: #{tpu_custom_call.1} parent=1 // pred_fallthru
      _
    // Predicated region
    $region38: #{tpu_custom_call.1} parent=1 // pred_check
      _
    $region39: #{tpu_custom_call.1} parent=1 // pred_check_branch
      %134 = sbr.rel (0) target = $region41
    $region40: #{tpu_custom_call.1} parent=1 // pred_region
      %135 = dma.done [#allocation9], 256
    $region41: #{tpu_custom_call.1} parent=1 // pred_fallthru
      _
    // Predicated region
    $region42: #{tpu_custom_call.1} parent=1 // pred_check
      _
    $region43: #{tpu_custom_call.1} parent=1 // pred_check_branch
      %137 = sbr.rel (0) target = $region45
    $region44: #{tpu_custom_call.1} parent=1 // pred_region
      %138 = dma.done [#allocation9], 128
    $region45: #{tpu_custom_call.1} parent=1 // pred_fallthru
      _
    // Predicated region
    $region46: #{tpu_custom_call.1} parent=1 // pred_check
      _
    $region47: #{tpu_custom_call.1} parent=1 // pred_check_branch
      %140 = sbr.rel (0) target = $region49
    $region48: #{tpu_custom_call.1} parent=1 // pred_region
      %141 = dma.done [#allocation12], 128
    $region49: #{tpu_custom_call.1} parent=1 // pred_fallthru
      _
    %142 = vsyncpa [#allocation3], 1
    %143 = vsyncpa [#allocation6], 1
    %144 = vsyncpa [#allocation4], 1
    %145 = vsyncpa [#allocation9], 1
    %146 = vsyncpa [#allocation12], 1

</llo_original>
